<compile_context>
chip_gen: v5e
topology: v5e:2x2
jax: 0.10.0
libtpu: 0.0.40
codegen_flags: <defaults>
</compile_context>

<pallas_src>
import numpy as np

import jax
import jax.numpy as jnp
from jax.experimental import pallas as pl
from jax.experimental.pallas import tpu as pltpu


def _round_up(v, m):
    return -(-v // m) * m


def _rope_kernel(x_ref, cos_ref, sin_ref, o_ref):
    # x_ref/o_ref: (1, ts, H, L); cos_ref/sin_ref: (ts, 1, L) -> broadcast over heads.
    x = x_ref[...].astype(cos_ref.dtype)
    lanes = x.shape[-1]
    c = cos_ref[...][None]           # (1, ts, 1, L): sublane broadcast over the head dim
    s = sin_ref[...][None]
    # Pair partner of every lane: even lane 2k needs x[2k+1], odd lane 2k+1 needs x[2k].
    # Non-negative shifts only; the wrapped lane is never selected, so no wrap masking.
    x_next = pltpu.roll(x, lanes - 1, 3)   # lane l -> x[l + 1]   (== jnp.roll(x, -1))
    x_prev = pltpu.roll(x, 1, 3)           # lane l -> x[l - 1]   (== jnp.roll(x, +1))
    lane_id = jax.lax.broadcasted_iota(jnp.int32, x.shape, 3)
    partner = jnp.where((lane_id & 1) == 0, x_next, x_prev)
    # out_even = x_e*cos - x_o*sin ; out_odd = x_o*cos + x_e*sin   (sign folded into table)
    o_ref[...] = (x * c + partner * s).astype(o_ref.dtype)


def _build_tables(s, h_d, base, g, dtype):
    # Mirrors _rope_init / build_rope_cache (cache[:seq_len], input_pos=None).  Under jit
    # with static (s, h_d, base) this is hoisted/reused across calls.
    hd2 = h_d // 2
    theta = 1.0 / (base ** (jnp.arange(0, h_d, 2, dtype=jnp.float32)[:hd2] / h_d))
    pos = jnp.arange(s, dtype=jnp.float32)
    idx = pos[:, None] * theta[None, :]                           # (s, hd2)
    cos = jnp.cos(idx)
    sin = jnp.sin(idx)
    cos_il = jnp.repeat(cos, 2, axis=-1)                          # [c0, c0, c1, c1, ...]
    sin_sg = jnp.stack([-sin, sin], axis=-1).reshape(s, h_d)      # [-s0, +s0, -s1, +s1, ...]
    if g > 1:                                                     # replicate per folded head
        cos_il = jnp.tile(cos_il, (1, g))
        sin_sg = jnp.tile(sin_sg, (1, g))
    return cos_il.astype(dtype)[:, None, :], sin_sg.astype(dtype)[:, None, :]   # (s, 1, L)


def _fold_heads(n_h, h_d):
    """Largest g dividing n_h with g*h_d <= 128: fold heads into lanes for dense stores."""
    if h_d >= 128:
        return 1
    for g in range(min(n_h, 128 // h_d), 0, -1):
        if n_h % g == 0:
            return g
    return 1


def _vmem_limit_bytes():
    # ~3/4 of physical VMEM (v7x: 64 MiB/TC -> 48 MiB; v5e/v6e: 128 MiB -> capped at 96 MiB);
    # fall back to a value that is safe on every generation.
    try:
        cap = int(pltpu.get_tpu_info().vmem_capacity_bytes)
    except Exception:
        cap = 64 * 1024 * 1024
    return int(min(cap * 3 // 4, 96 * 1024 * 1024))


def _choose_seq_tile(s, row_bytes, budget_bytes):
    cap = max(1, budget_bytes // max(row_bytes, 1))
    if s <= cap:
        return s
    return max(8, (cap // 8) * 8)        # 8-aligned; grid uses cdiv (masked tail block)


def rope_pallas(x, dim, base=10000, compute_dtype=jnp.float32):
    """Apply RoPE to x of shape [b, s, n_h, h_d] (h_d == dim), input_pos=None semantics."""
    b, s, n_h, h_d = x.shape
    assert h_d == dim and h_d % 2 == 0

    # Fold g heads into the lane dim (free reshape: last two dims are contiguous).
    g = _fold_heads(n_h, h_d)
    H, L = n_h // g, g * h_d
    xf = x.reshape(b, s, H, L)

    cos_t, sin_t = _build_tables(s, h_d, base, g, compute_dtype)    # (s, 1, L) each

    # VMEM budget per sequence row: double-buffered x in/out blocks, in-kernel compute
    # temporaries (upcast + two rolls + iota/select), and the sublane-padded table blocks.
    xsz = x.dtype.itemsize
    csz = np.dtype(compute_dtype).itemsize
    tsz = max(csz, xsz)
    hp, lp = _round_up(H, 8), _round_up(L, 128)
    row_bytes = (4 * hp * lp * xsz          # x in + out, double-buffered
                 + 4 * hp * lp * tsz        # in-kernel temporaries
                 + 2 * 2 * 8 * lp * csz)    # 2 tables, padded to 8 sublanes, double-buffered
    vmem_limit = _vmem_limit_bytes()
    ts = _choose_seq_tile(s, row_bytes, (vmem_limit * 3) // 4)
    num_st = pl.cdiv(s, ts)
    if num_st * b < 2 and s >= 16:          # make sure both v7x TensorCores get work
        ts = _round_up(pl.cdiv(s, 2), 8)
        num_st = pl.cdiv(s, ts)

    x_spec = pl.BlockSpec((1, ts, H, L), lambda si, bi: (bi, si, 0, 0))
    t_spec = pl.BlockSpec((ts, 1, L), lambda si, bi: (si, 0, 0))

    out = pl.pallas_call(
        _rope_kernel,
        out_shape=jax.ShapeDtypeStruct((b, s, H, L), x.dtype),
        grid=(num_st, b),                    # batch innermost: table blocks reused across b
        in_specs=[x_spec, t_spec, t_spec],
        out_specs=x_spec,
        compiler_params=pltpu.CompilerParams(
            dimension_semantics=("parallel", "parallel"),
            vmem_limit_bytes=vmem_limit),
        cost_estimate=pl.CostEstimate(
            flops=4 * b * s * n_h * h_d,
            transcendentals=0,
            bytes_accessed=2 * b * s * n_h * h_d * xsz + 2 * s * L * csz),
    )(xf, cos_t, sin_t)
    return out.reshape(b, s, n_h, h_d)


def rope_ref(x, dim, base=10000):
    """Pure-JAX replica of the PyTorch forward (input_pos=None) for verification."""
    b, s, n_h, h_d = x.shape
    hd2 = h_d // 2
    theta = 1.0 / (base ** (jnp.arange(0, dim, 2, dtype=jnp.float32)[: dim // 2] / dim))
    pos = jnp.arange(s, dtype=jnp.float32)
    idx = pos[:, None] * theta[None, :]
    cache = jnp.stack([jnp.cos(idx), jnp.sin(idx)], axis=-1)        # [s, hd2, 2]
    xs = x.astype(jnp.float32).reshape(b, s, n_h, hd2, 2)
    rc = cache.reshape(1, s, 1, hd2, 2)
    out = jnp.stack([xs[..., 0] * rc[..., 0] - xs[..., 1] * rc[..., 1],
                     xs[..., 1] * rc[..., 0] + xs[..., 0] * rc[..., 1]], axis=-1)
    return out.reshape(b, s, n_h, h_d).astype(x.dtype)


if __name__ == "__main__":
    b, s, n_h, h_d = 2, 8, 4, 32            # x: [b, s, n_h, h_d]
    key = jax.random.PRNGKey(0)
    x = jax.random.normal(key, (b, s, n_h, h_d), dtype=jnp.float32)

    out = rope_pallas(x, dim=h_d, base=10000)
    out = jax.block_until_ready(out)

    ref = rope_ref(x, dim=h_d, base=10000)
    assert out.shape == x.shape and out.dtype == x.dtype
    assert jnp.allclose(out, ref, atol=1e-5, rtol=1e-5), "mismatch vs reference"
    print("KERNEL_OK")
</pallas_src>

<mosaic_0001>
module attributes {stable_mosaic.version = 11 : i64} {
  func.func @_rope_kernel(%arg0: i32, %arg1: i32, %arg2: memref<1x8x1x128xf32, #tpu.memory_space<vmem>>, %arg3: memref<8x1x128xf32, #tpu.memory_space<vmem>>, %arg4: memref<8x1x128xf32, #tpu.memory_space<vmem>>, %arg5: memref<1x8x1x128xf32, #tpu.memory_space<vmem>>) attributes {dimension_semantics = [#tpu.dimension_semantics<parallel>, #tpu.dimension_semantics<parallel>], iteration_bounds = array<i64: 1, 2>, scalar_prefetch = 0 : i64, scratch_operands = 0 : i64, tpu.core_type = #tpu.core_type<tc>, window_params = [{transform_indices = @transform_0, window_bounds = array<i64: 1, 8, 1, 128>}, {transform_indices = @transform_1, window_bounds = array<i64: 8, 1, 128>}, {transform_indices = @transform_2, window_bounds = array<i64: 8, 1, 128>}, {transform_indices = @transform_3, window_bounds = array<i64: 1, 8, 1, 128>}]} {
    %c0 = arith.constant 0 : index
    %c0_0 = arith.constant 0 : index
    %c0_1 = arith.constant 0 : index
    %c0_2 = arith.constant 0 : index
    %0 = vector.load %arg2[%c0, %c0_0, %c0_1, %c0_2] : memref<1x8x1x128xf32, #tpu.memory_space<vmem>>, vector<1x8x1x128xf32>
    %c0_3 = arith.constant 0 : index
    %c0_4 = arith.constant 0 : index
    %c0_5 = arith.constant 0 : index
    %1 = vector.load %arg3[%c0_3, %c0_4, %c0_5] : memref<8x1x128xf32, #tpu.memory_space<vmem>>, vector<8x1x128xf32>
    %2 = vector.shape_cast %1 : vector<8x1x128xf32> to vector<1x8x1x128xf32>
    %c0_6 = arith.constant 0 : index
    %c0_7 = arith.constant 0 : index
    %c0_8 = arith.constant 0 : index
    %3 = vector.load %arg4[%c0_6, %c0_7, %c0_8] : memref<8x1x128xf32, #tpu.memory_space<vmem>>, vector<8x1x128xf32>
    %4 = vector.shape_cast %3 : vector<8x1x128xf32> to vector<1x8x1x128xf32>
    %c127_i32 = arith.constant 127 : i32
    %5 = tpu.dynamic_rotate %0 by %c127_i32 dim 3 : vector<1x8x1x128xf32>, i32 -> vector<1x8x1x128xf32>
    %c1_i32 = arith.constant 1 : i32
    %6 = tpu.dynamic_rotate %0 by %c1_i32 dim 3 : vector<1x8x1x128xf32>, i32 -> vector<1x8x1x128xf32>
    %7 = tpu.iota {dimensions = array<i32: 3>} : vector<1x8x1x128xi32>
    %c1_i32_9 = arith.constant 1 : i32
    %8 = vector.broadcast %c1_i32_9 : i32 to vector<1x8x1x128xi32>
    %9 = arith.andi %7, %8 : vector<1x8x1x128xi32>
    %c0_i32 = arith.constant 0 : i32
    %10 = vector.broadcast %c0_i32 : i32 to vector<1x8x1x128xi32>
    %11 = arith.cmpi eq, %9, %10 : vector<1x8x1x128xi32>
    %12 = arith.select %11, %5, %6 : vector<1x8x1x128xi1>, vector<1x8x1x128xf32>
    %13 = arith.mulf %0, %2 : vector<1x8x1x128xf32>
    %14 = arith.mulf %12, %4 : vector<1x8x1x128xf32>
    %15 = arith.addf %13, %14 : vector<1x8x1x128xf32>
    %c0_10 = arith.constant 0 : index
    %c0_11 = arith.constant 0 : index
    %c0_12 = arith.constant 0 : index
    %c0_13 = arith.constant 0 : index
    %16 = vector.load %arg5[%c0_10, %c0_11, %c0_12, %c0_13] : memref<1x8x1x128xf32, #tpu.memory_space<vmem>>, vector<1x8x1x128xf32>
    tpu.vector_store %arg5[%c0_10, %c0_11, %c0_12, %c0_13], %15 {strides = array<i32>} : memref<1x8x1x128xf32, #tpu.memory_space<vmem>>, vector<1x8x1x128xf32>,
    return
  }
  func.func @transform_0(%arg0: i32, %arg1: i32) -> (i32, i32, i32, i32) {
    %c0_i32 = arith.constant 0 : i32
    %c0_i32_0 = arith.constant 0 : i32
    %c0_i32_1 = arith.constant 0 : i32
    return %arg1, %arg0, %c0_i32, %c0_i32_0 : i32, i32, i32, i32
  }
  func.func @transform_1(%arg0: i32, %arg1: i32) -> (i32, i32, i32) {
    %c0_i32 = arith.constant 0 : i32
    %c0_i32_0 = arith.constant 0 : i32
    %c0_i32_1 = arith.constant 0 : i32
    return %arg0, %c0_i32, %c0_i32_0 : i32, i32, i32
  }
  func.func @transform_2(%arg0: i32, %arg1: i32) -> (i32, i32, i32) {
    %c0_i32 = arith.constant 0 : i32
    %c0_i32_0 = arith.constant 0 : i32
    %c0_i32_1 = arith.constant 0 : i32
    return %arg0, %c0_i32, %c0_i32_0 : i32, i32, i32
  }
  func.func @transform_3(%arg0: i32, %arg1: i32) -> (i32, i32, i32, i32) {
    %c0_i32 = arith.constant 0 : i32
    %c0_i32_0 = arith.constant 0 : i32
    %c0_i32_1 = arith.constant 0 : i32
    return %arg1, %arg0, %c0_i32, %c0_i32_0 : i32, i32, i32, i32
  }
}

</mosaic_0001>

<llo_original>
// kernel: tpu_custom_call.1
$region0: #{tpu_custom_call.1}
  #allocation0 [shape = 'u32[]', space=smem, size = 0x4, offset = 0x4, fixed_abs, tag = 'smem constant byte address 0x4 - core index']
  #allocation1 [shape = 'u32[72,128]{1,0:T(1,128)}', space=vmem, size = 0x9000, scoped, tag = 'internal scratch']
  %s0 = inlined_call_operand.hbm [shape: f32[2,8,1,128], index: 0, kind: input, shape index: {}]
  %s1 = inlined_call_operand.hbm [shape: f32[8,1,128], index: 1, kind: input, shape index: {}]
  %s2 = inlined_call_operand.hbm [shape: f32[8,1,128], index: 2, kind: input, shape index: {}]
  %s3 = inlined_call_operand.hbm [shape: f32[2,8,1,128], index: 3, kind: output, shape index: {}]
  %s4 = sld [smem:[#allocation0]]
  $region57: #{tpu_custom_call.1} parent=0
    _
  %s6 = ssub.s32 1, %s4
  %s7 = scalar_select 0, %s6, %s4
  $region1: #{tpu_custom_call.1} parent=0
    #allocation2 [shape = 'u8[8192]{0}', space=vmem, size = 0x2000, scoped, tag = 'input window, operand 0']
    #allocation3 [shape = 's32[2]{0}', space=sflag, size = 0x8, scoped, tag = 'scoped memory for tpu_custom_call.1']
    #allocation4 [shape = 's32[2]{0}', space=sflag, size = 0x8, scoped, tag = 'scoped memory for tpu_custom_call.1']
    #allocation5 [shape = 'u8[4096]{0}', space=vmem, size = 0x1000, scoped, tag = 'input window, operand 1, single buffered']
    #allocation6 [shape = 's32[1]{0}', space=sflag, size = 0x4, scoped, tag = 'scoped memory for tpu_custom_call.1']
    #allocation7 [shape = 'u8[4096]{0}', space=vmem, size = 0x1000, scoped, tag = 'input window, operand 2, single buffered']
    #allocation8 [shape = 'u8[8192]{0}', space=vmem, size = 0x2000, scoped, tag = 'output window, operand 0']
    %8 = vsyncpa [#allocation3], 0
    %s9 = scalar_lea.sflag [#allocation3], 1
    %10 = vsyncpa %s9, 0
    %11 = vsyncpa [#allocation6], 0
    %12 = vsyncpa [#allocation4], 0
    %s13 = scalar_lea.sflag [#allocation4], 1
    %14 = vsyncpa %s13, 0
    loop: start=0, step=1, limit=4
    $region2: #{tpu_custom_call.1} parent=1 // loop_pre_header
      _
    $region3: #{tpu_custom_call.1} parent=1 // loop_header
      %s16 = sphi 0, %s20
      %p17 = scmp.ge.s32.totalorder %s16, 4
      %s23 = sphi 0, %s35
      %s24 = sphi 0, %s31
      %s25 = sphi 0, %s23
      %s26 = sphi 0, %s24
      %s27 = sphi 0, %s25
      %s28 = sphi 0, %s26
      %s40 = sphi 0, %s42
      %s43 = sphi 0, %s40
      %s44 = sphi 0, %s43
      %s60 = sphi 0, %s44
      %s66 = sphi 0, %s68
      %s69 = sphi 0, %s66
      %s70 = sphi 0, %s69
      %s86 = sphi 0, %s70
      %s92 = sphi 0, %s94
      %s95 = sphi 0, %s92
      %s96 = sphi 0, %s95
      %s112 = sphi 0, %s96
      %s120 = sphi 0, %s122
      %s123 = sphi 0, %s120
      %s124 = sphi 0, %s123
      %s140 = sphi 0, %s124
    $region4: #{tpu_custom_call.1} parent=1 // loop_header_branch
      %19 = sbr.rel (%p17) target = $region8
    $region5: #{tpu_custom_call.1} parent=1 // loop_body
      %s21 = ssub.s32 %s16, 1
      %s22 = ssub.s32 %s16, 2
      %s29 = sadd.s32 1, %s24
      %p30 = scmp.ge.s32.totalorder %s29, 2
      %s31 = scalar_select %p30, 0, %s29
      %s32 = sadd.s32 1, %s23
      %s33 = scalar_select %p30, %s32, %s23
      %p34 = scmp.ge.s32.totalorder %s33, 1
      %s35 = scalar_select %p34, 0, %s33
      %s36 = ssub.s32 %s24, %s31
      %s37 = ssub.s32 %s23, %s35
      %s38 = sor.u32 %s36, %s37
      %p39 = scmp.eq.s32.totalorder %s38, 0
      %s41 = sadd.s32 %s40, 1
      %s42 = scalar_select %p39, %s40, %s41
      %p45 = pneg %p39
      %p46 = scmp.eq.s32.totalorder %s16, 1
      %p47 = por %p45, %p46
      %p48 = scmp.ne.s32.totalorder %s40, %s43
      %p49 = scmp.eq.s32.totalorder %s16, 0
      %p50 = por %p48, %p49
      %p51 = scmp.ne.s32.totalorder %s40, %s43
      %p52 = scmp.eq.s32.totalorder %s21, 1
      %p53 = por %p51, %p52
      %p54 = scmp.ne.s32.totalorder %s43, %s44
      %p55 = scmp.eq.s32.totalorder %s21, 0
      %p56 = por %p54, %p55
      %p57 = scmp.ne.s32.totalorder %s43, %s44
      %p58 = scmp.eq.s32.totalorder %s22, 1
      %p59 = por %p57, %p58
      %p61 = scmp.ne.s32.totalorder %s44, %s60
      %p62 = scmp.eq.s32.totalorder %s22, 0
      %p63 = por %p61, %p62
      %s64 = ssub.s32 %s23, %s35
      %p65 = scmp.eq.s32.totalorder %s64, 0
      %s67 = sadd.s32 %s66, 1
      %s68 = scalar_select %p65, %s66, %s67
      %p71 = pneg %p65
      %p72 = scmp.eq.s32.totalorder %s16, 1
      %p73 = por %p71, %p72
      %p74 = scmp.ne.s32.totalorder %s66, %s69
      %p75 = scmp.eq.s32.totalorder %s16, 0
      %p76 = por %p74, %p75
      %p77 = scmp.ne.s32.totalorder %s66, %s69
      %p78 = scmp.eq.s32.totalorder %s21, 1
      %p79 = por %p77, %p78
      %p80 = scmp.ne.s32.totalorder %s69, %s70
      %p81 = scmp.eq.s32.totalorder %s21, 0
      %p82 = por %p80, %p81
      %p83 = scmp.ne.s32.totalorder %s69, %s70
      %p84 = scmp.eq.s32.totalorder %s22, 1
      %p85 = por %p83, %p84
      %p87 = scmp.ne.s32.totalorder %s70, %s86
      %p88 = scmp.eq.s32.totalorder %s22, 0
      %p89 = por %p87, %p88
      %s90 = ssub.s32 %s23, %s35
      %p91 = scmp.eq.s32.totalorder %s90, 0
      %s93 = sadd.s32 %s92, 1
      %s94 = scalar_select %p91, %s92, %s93
      %p97 = pneg %p91
      %p98 = scmp.eq.s32.totalorder %s16, 1
      %p99 = por %p97, %p98
      %p100 = scmp.ne.s32.totalorder %s92, %s95
      %p101 = scmp.eq.s32.totalorder %s16, 0
      %p102 = por %p100, %p101
      %p103 = scmp.ne.s32.totalorder %s92, %s95
      %p104 = scmp.eq.s32.totalorder %s21, 1
      %p105 = por %p103, %p104
      %p106 = scmp.ne.s32.totalorder %s95, %s96
      %p107 = scmp.eq.s32.totalorder %s21, 0
      %p108 = por %p106, %p107
      %p109 = scmp.ne.s32.totalorder %s95, %s96
      %p110 = scmp.eq.s32.totalorder %s22, 1
      %p111 = por %p109, %p110
      %p113 = scmp.ne.s32.totalorder %s96, %s112
      %p114 = scmp.eq.s32.totalorder %s22, 0
      %p115 = por %p113, %p114
      %s116 = ssub.s32 %s24, %s31
      %s117 = ssub.s32 %s23, %s35
      %s118 = sor.u32 %s116, %s117
      %p119 = scmp.eq.s32.totalorder %s118, 0
      %s121 = sadd.s32 %s120, 1
      %s122 = scalar_select %p119, %s120, %s121
      %p125 = pneg %p119
      %p126 = scmp.eq.s32.totalorder %s16, 1
      %p127 = por %p125, %p126
      %p128 = scmp.ne.s32.totalorder %s120, %s123
      %p129 = scmp.eq.s32.totalorder %s16, 0
      %p130 = por %p128, %p129
      %p131 = scmp.ne.s32.totalorder %s120, %s123
      %p132 = scmp.eq.s32.totalorder %s21, 1
      %p133 = por %p131, %p132
      %p134 = scmp.ne.s32.totalorder %s123, %s124
      %p135 = scmp.eq.s32.totalorder %s21, 0
      %p136 = por %p134, %p135
      %p137 = scmp.ne.s32.totalorder %s123, %s124
      %p138 = scmp.eq.s32.totalorder %s22, 1
      %p139 = por %p137, %p138
      %p141 = scmp.ne.s32.totalorder %s124, %s140
      %p142 = scmp.eq.s32.totalorder %s22, 0
      %p143 = por %p141, %p142
      %p144 = scmp.le.s32.totalorder 1, %s16
      %p145 = scmp.lt.s32.totalorder %s16, 3
      %p146 = pnand %p144, %p145
      %p147 = pneg %p146
      // Predicated region
      $region9: #{tpu_custom_call.1} parent=5 // pred_check
        _
      $region10: #{tpu_custom_call.1} parent=5 // pred_check_branch
        %149 = sbr.rel (%p146) target = $region12
      $region11: #{tpu_custom_call.1} parent=5 // pred_region
        %s150 = ssub.s32 %s16, 1
        // Predicated region
        $region13: #{tpu_custom_call.1} parent=11 // pred_check
          %p151 = pneg %p82
        $region14: #{tpu_custom_call.1} parent=11 // pred_check_branch
          %153 = sbr.rel (%p151) target = $region16
        $region15: #{tpu_custom_call.1} parent=11 // pred_region
          %s154 = smul.u32 8, %s25
          %156 = vsyncadd [#allocation6], 0
          %s157 = scalar_lea.hbm %s1, %s154
          %s158 = sshll.u32 %s157, 4
          %s159 = int_to_ptr.hbm [resolvable:$true] %s158
          %s160 = sshll.u32 [#allocation5], 4
          %s161 = int_to_ptr.vmem [resolvable:$true] %s160
          %166 = dma.hbm_to_vmem [thread:$0]  %s159, 128, %s161, [#allocation6], 16, 16, 1
        $region16: #{tpu_custom_call.1} parent=11 // pred_fallthru
          _
        // Predicated region
        $region17: #{tpu_custom_call.1} parent=11 // pred_check
          %p167 = pneg %p108
        $region18: #{tpu_custom_call.1} parent=11 // pred_check_branch
          %169 = sbr.rel (%p167) target = $region20
        $region19: #{tpu_custom_call.1} parent=11 // pred_region
          %s170 = smul.u32 8, %s25
          %172 = vsyncadd [#allocation6], 0
          %s173 = scalar_lea.hbm %s2, %s170
          %s174 = sshll.u32 %s173, 4
          %s175 = int_to_ptr.hbm [resolvable:$true] %s174
          %s176 = sshll.u32 [#allocation7], 4
          %s177 = int_to_ptr.vmem [resolvable:$true] %s176
          %182 = dma.hbm_to_vmem [thread:$0]  %s175, 128, %s177, [#allocation6], 16, 16, 1
        $region20: #{tpu_custom_call.1} parent=11 // pred_fallthru
          _
      $region12: #{tpu_custom_call.1} parent=5 // pred_fallthru
        _
      %p183 = scmp.lt.s32.totalorder %s16, 2
      // Predicated region
      $region21: #{tpu_custom_call.1} parent=5 // pred_check
        %p184 = pneg %p183
      $region22: #{tpu_custom_call.1} parent=5 // pred_check_branch
        %186 = sbr.rel (%p184) target = $region24
      $region23: #{tpu_custom_call.1} parent=5 // pred_region
        // Predicated region
        $region25: #{tpu_custom_call.1} parent=23 // pred_check
          %p187 = pneg %p50
        $region26: #{tpu_custom_call.1} parent=23 // pred_check_branch
          %189 = sbr.rel (%p187) target = $region28
        $region27: #{tpu_custom_call.1} parent=23 // pred_region
          %s190 = sand.u32 %s40, 1
          %s191 = scalar_lea.sflag [#allocation3], %s190
          %s192 = sand.u32 %s40, 1
          %s193 = smul.addr %s192, 8
          %s194 = scalar_lea.vmem [#allocation2], %s193
          %s195 = smul.u32 8, %s23
          %197 = vsyncadd %s191, 0
          %s198 = smul.addr %s24, 8
          %s199 = sadd.s32 %s195, %s198
          %s200 = scalar_lea.hbm %s0, %s199
          %s201 = sshll.u32 %s200, 4
          %s202 = int_to_ptr.hbm [resolvable:$true] %s201
          %s203 = sshll.u32 %s194, 4
          %s204 = int_to_ptr.vmem [resolvable:$true] %s203
          %209 = dma.hbm_to_vmem [thread:$0]  %s202, 128, %s204, %s191, 16, 16, 1
        $region28: #{tpu_custom_call.1} parent=23 // pred_fallthru
          _
      $region24: #{tpu_custom_call.1} parent=5 // pred_fallthru
        _
      %p210 = scmp.le.s32.totalorder 1, %s16
      %p211 = scmp.lt.s32.totalorder %s16, 3
      %p212 = pnand %p210, %p211
      %p213 = pneg %p212
      // Predicated region
      $region29: #{tpu_custom_call.1} parent=5 // pred_check
        _
      $region30: #{tpu_custom_call.1} parent=5 // pred_check_branch
        %215 = sbr.rel (%p212) target = $region32
      $region31: #{tpu_custom_call.1} parent=5 // pred_region
        %s216 = ssub.s32 %s16, 1
        %s217 = sand.u32 %s43, 1
        %s218 = scalar_lea.sflag [#allocation3], %s217
        %s219 = sand.u32 %s43, 1
        %s220 = smul.addr %s219, 8
        %s221 = scalar_lea.vmem [#allocation2], %s220
        // Predicated region
        $region33: #{tpu_custom_call.1} parent=31 // pred_check
          %p222 = pneg %p56
        $region34: #{tpu_custom_call.1} parent=31 // pred_check_branch
          %224 = sbr.rel (%p222) target = $region36
        $region35: #{tpu_custom_call.1} parent=31 // pred_region
          %226 = dma.done %s218, 128
        $region36: #{tpu_custom_call.1} parent=31 // pred_fallthru
          _
        // Predicated region
        $region37: #{tpu_custom_call.1} parent=31 // pred_check
          %p227 = pneg %p82
        $region38: #{tpu_custom_call.1} parent=31 // pred_check_branch
          %229 = sbr.rel (%p227) target = $region40
        $region39: #{tpu_custom_call.1} parent=31 // pred_region
          %231 = dma.done [#allocation6], 128
        $region40: #{tpu_custom_call.1} parent=31 // pred_fallthru
          _
        // Predicated region
        $region41: #{tpu_custom_call.1} parent=31 // pred_check
          %p232 = pneg %p108
        $region42: #{tpu_custom_call.1} parent=31 // pred_check_branch
          %234 = sbr.rel (%p232) target = $region44
        $region43: #{tpu_custom_call.1} parent=31 // pred_region
          %236 = dma.done [#allocation6], 128
        $region44: #{tpu_custom_call.1} parent=31 // pred_fallthru
          _
        %s237 = sand.u32 %s43, 1
        %s238 = scalar_lea.sflag [#allocation3], %s237
        %s239 = sand.u32 %s43, 1
        %s240 = smul.addr %s239, 8
        %s241 = scalar_lea.vmem [#allocation2], %s240
        %p242 = pneg %p56
        %p243 = pneg %p53
        %p244 = pneg %p82
        %p245 = pneg %p79
        %p246 = pneg %p108
        %p247 = pneg %p105
        %p248 = pneg %p136
        %p249 = pneg %p133
        %s250 = sand.u32 %s123, 1
        %s251 = scalar_lea.sflag [#allocation4], %s250
        %s252 = sand.u32 %s123, 1
        %s253 = smul.addr %s252, 8
        %s254 = scalar_lea.vmem [#allocation8], %s253
        %s255 = smul.u32 8, %s25
        %s256 = smul.u32 8, %s25
        %s257 = smul.u32 8, %s25
        %s258 = smul.u32 8, %s25
        %v259 = vld [vmem:[%s221] sm:$0x1]
        %v260 = vld [vmem:[%s221 + $0x1] sm:$0x1]
        %v261 = vld [vmem:[%s221 + $0x2] sm:$0x1]
        %v262 = vld [vmem:[%s221 + $0x3] sm:$0x1]
        %v263 = vld [vmem:[%s221 + $0x4] sm:$0x1]
        %v264 = vld [vmem:[%s221 + $0x5] sm:$0x1]
        %v265 = vld [vmem:[%s221 + $0x6] sm:$0x1]
        %v266 = vld [vmem:[%s221 + $0x7] sm:$0x1]
        %v267 = vld [vmem:[#allocation5] sm:$0x1]
        %v268 = vld [vmem:[#allocation5 + $0x1] sm:$0x1]
        %v269 = vld [vmem:[#allocation5 + $0x2] sm:$0x1]
        %v270 = vld [vmem:[#allocation5 + $0x3] sm:$0x1]
        %v271 = vld [vmem:[#allocation5 + $0x4] sm:$0x1]
        %v272 = vld [vmem:[#allocation5 + $0x5] sm:$0x1]
        %v273 = vld [vmem:[#allocation5 + $0x6] sm:$0x1]
        %v274 = vld [vmem:[#allocation5 + $0x7] sm:$0x1]
        %v275 = vld [vmem:[#allocation7] sm:$0x1]
        %v276 = vld [vmem:[#allocation7 + $0x1] sm:$0x1]
        %v277 = vld [vmem:[#allocation7 + $0x2] sm:$0x1]
        %v278 = vld [vmem:[#allocation7 + $0x3] sm:$0x1]
        %v279 = vld [vmem:[#allocation7 + $0x4] sm:$0x1]
        %v280 = vld [vmem:[#allocation7 + $0x5] sm:$0x1]
        %v281 = vld [vmem:[#allocation7 + $0x6] sm:$0x1]
        %v282 = vld [vmem:[#allocation7 + $0x7] sm:$0x1]
        %283 = vrot.lane.b32.xlu0 %v259, 127
        %v284 = vpop.permute.xlu0 %283
        %285 = vrot.lane.b32.xlu0 %v260, 127
        %v286 = vpop.permute.xlu0 %285
        %287 = vrot.lane.b32.xlu0 %v261, 127
        %v288 = vpop.permute.xlu0 %287
        %289 = vrot.lane.b32.xlu0 %v262, 127
        %v290 = vpop.permute.xlu0 %289
        %291 = vrot.lane.b32.xlu0 %v263, 127
        %v292 = vpop.permute.xlu0 %291
        %293 = vrot.lane.b32.xlu0 %v264, 127
        %v294 = vpop.permute.xlu0 %293
        %295 = vrot.lane.b32.xlu0 %v265, 127
        %v296 = vpop.permute.xlu0 %295
        %297 = vrot.lane.b32.xlu0 %v266, 127
        %v298 = vpop.permute.xlu0 %297
        %299 = vrot.lane.b32.xlu0 %v259, 1
        %v300 = vpop.permute.xlu0 %299
        %301 = vrot.lane.b32.xlu0 %v260, 1
        %v302 = vpop.permute.xlu0 %301
        %303 = vrot.lane.b32.xlu0 %v261, 1
        %v304 = vpop.permute.xlu0 %303
        %305 = vrot.lane.b32.xlu0 %v262, 1
        %v306 = vpop.permute.xlu0 %305
        %307 = vrot.lane.b32.xlu0 %v263, 1
        %v308 = vpop.permute.xlu0 %307
        %309 = vrot.lane.b32.xlu0 %v264, 1
        %v310 = vpop.permute.xlu0 %309
        %311 = vrot.lane.b32.xlu0 %v265, 1
        %v312 = vpop.permute.xlu0 %311
        %313 = vrot.lane.b32.xlu0 %v266, 1
        %v314 = vpop.permute.xlu0 %313
        %v315 = vlaneseq
        %v316 = vand.u32 %v315, 127
        %v317 = vand.u32 %v316, 1
        %vm318 = vcmp.eq.s32.totalorder %v317, 0
        %v319 = vsel %vm318, %v284, %v300
        %v320 = vsel %vm318, %v286, %v302
        %v321 = vsel %vm318, %v288, %v304
        %v322 = vsel %vm318, %v290, %v306
        %v323 = vsel %vm318, %v292, %v308
        %v324 = vsel %vm318, %v294, %v310
        %v325 = vsel %vm318, %v296, %v312
        %v326 = vsel %vm318, %v298, %v314
        %v327 = vmul.f32 %v259, %v267
        %v328 = vmul.f32 %v260, %v268
        %v329 = vmul.f32 %v261, %v269
        %v330 = vmul.f32 %v262, %v270
        %v331 = vmul.f32 %v263, %v271
        %v332 = vmul.f32 %v264, %v272
        %v333 = vmul.f32 %v265, %v273
        %v334 = vmul.f32 %v266, %v274
        %v335 = vmul.f32 %v319, %v275
        %v336 = vmul.f32 %v320, %v276
        %v337 = vmul.f32 %v321, %v277
        %v338 = vmul.f32 %v322, %v278
        %v339 = vmul.f32 %v323, %v279
        %v340 = vmul.f32 %v324, %v280
        %v341 = vmul.f32 %v325, %v281
        %v342 = vmul.f32 %v326, %v282
        %v343 = vadd.f32 %v327, %v335
        %v344 = vadd.f32 %v328, %v336
        %v345 = vadd.f32 %v329, %v337
        %v346 = vadd.f32 %v330, %v338
        %v347 = vadd.f32 %v331, %v339
        %v348 = vadd.f32 %v332, %v340
        %v349 = vadd.f32 %v333, %v341
        %v350 = vadd.f32 %v334, %v342
        %351 = vst [vmem:[%s254] sm:$0x1] %v343
        %352 = vst [vmem:[%s254 + $0x1] sm:$0x1] %v344
        %353 = vst [vmem:[%s254 + $0x2] sm:$0x1] %v345
        %354 = vst [vmem:[%s254 + $0x3] sm:$0x1] %v346
        %355 = vst [vmem:[%s254 + $0x4] sm:$0x1] %v347
        %356 = vst [vmem:[%s254 + $0x5] sm:$0x1] %v348
        %357 = vst [vmem:[%s254 + $0x6] sm:$0x1] %v349
        %358 = vst [vmem:[%s254 + $0x7] sm:$0x1] %v350
        %s359 = sand.u32 %s123, 1
        %s360 = scalar_lea.sflag [#allocation4], %s359
        %s361 = sand.u32 %s123, 1
        %s362 = smul.addr %s361, 8
        %s363 = scalar_lea.vmem [#allocation8], %s362
        // Predicated region
        $region45: #{tpu_custom_call.1} parent=31 // pred_check
          %p364 = pneg %p133
        $region46: #{tpu_custom_call.1} parent=31 // pred_check_branch
          %366 = sbr.rel (%p364) target = $region48
        $region47: #{tpu_custom_call.1} parent=31 // pred_region
          %s367 = smul.u32 8, %s25
          %369 = vsyncadd %s360, 0
          %s370 = smul.addr %s26, 8
          %s371 = sadd.s32 %s367, %s370
          %s372 = scalar_lea.hbm %s3, %s371
          %s373 = sshll.u32 %s363, 4
          %s374 = int_to_ptr.vmem [resolvable:$true] %s373
          %s375 = sshll.u32 %s372, 4
          %s376 = int_to_ptr.hbm [resolvable:$true] %s375
          %381 = dma.vmem_to_hbm [thread:$0]  %s374, 128, %s376, %s360, 16, 16, 1
        $region48: #{tpu_custom_call.1} parent=31 // pred_fallthru
          _
      $region32: #{tpu_custom_call.1} parent=5 // pred_fallthru
        _
      %p382 = scmp.le.s32.totalorder 2, %s16
      // Predicated region
      $region49: #{tpu_custom_call.1} parent=5 // pred_check
        %p383 = pneg %p382
      $region50: #{tpu_custom_call.1} parent=5 // pred_check_branch
        %385 = sbr.rel (%p383) target = $region52
      $region51: #{tpu_custom_call.1} parent=5 // pred_region
        %s386 = ssub.s32 %s16, 2
        // Predicated region
        $region53: #{tpu_custom_call.1} parent=51 // pred_check
          %p387 = pneg %p139
        $region54: #{tpu_custom_call.1} parent=51 // pred_check_branch
          %389 = sbr.rel (%p387) target = $region56
        $region55: #{tpu_custom_call.1} parent=51 // pred_region
          %s390 = sand.u32 %s124, 1
          %s391 = scalar_lea.sflag [#allocation4], %s390
          %s392 = sand.u32 %s124, 1
          %s393 = smul.addr %s392, 8
          %s394 = scalar_lea.vmem [#allocation8], %s393
          %396 = dma.done %s391, 128
        $region56: #{tpu_custom_call.1} parent=51 // pred_fallthru
          _
      $region52: #{tpu_custom_call.1} parent=5 // pred_fallthru
        _
    $region6: #{tpu_custom_call.1} parent=1 // loop_footer
      %s20 = sadd.s32 1, %s16
    $region7: #{tpu_custom_call.1} parent=1 // loop_footer_branch
      %15 = sbr.rel target = $region3
    $region8: #{tpu_custom_call.1} parent=1 // loop_exit
      _
    %397 = vsyncpa [#allocation3], 1
    %s398 = scalar_lea.sflag [#allocation3], 1
    %399 = vsyncpa %s398, 1
    %400 = vsyncpa [#allocation6], 1
    %401 = vsyncpa [#allocation4], 1
    %s402 = scalar_lea.sflag [#allocation4], 1
    %403 = vsyncpa %s402, 1

</llo_original>
